<compile_context>
chip_gen: v7x
topology: tpu7x:2x2x1
jax: 0.10.0
libtpu: 0.0.40
codegen_flags: <defaults>
</compile_context>

<pallas_src>
import numpy as np
import jax
import jax.numpy as jnp
from jax import lax
from jax.experimental import pallas as pl
from jax.experimental.pallas import tpu as pltpu


# --------------------------------------------------------------------------- #
# Kernel
# --------------------------------------------------------------------------- #
def _segment3_kernel(uid_ref, emb_ref, morph_ref, out_ref):
    # uid_ref   : SMEM (n_tiles,) int32   scalar prefetch; consumed by index_maps only
    # emb_ref   : VMEM (block_m, D)       this tile's item embeddings (single user)
    # morph_ref : VMEM (1, D, D)          that user's morph matrix
    # out_ref   : VMEM (block_m, D)
    del uid_ref
    emb = emb_ref[...]                                    # native dtype (f32/bf16)
    morph = morph_ref[0]                                  # (D, D)
    # y[n, j] = sum_k emb[n, k] * morph[k, j]  -> MXU matmul, f32 accumulation
    y = jnp.dot(emb, morph, preferred_element_type=jnp.float32)
    z = emb.astype(jnp.float32) + y
    sq = jnp.sum(z * z, axis=-1, keepdims=True)           # (block_m, 1)
    # F.normalize eps clamp: z / max(||z||, 1e-12) == z * rsqrt(max(sq, 1e-24))
    out_ref[...] = (z * lax.rsqrt(jnp.maximum(sq, 1e-24))).astype(out_ref.dtype)


# --------------------------------------------------------------------------- #
# Host-side planning: group items by user, pad each run to a block_m multiple
# --------------------------------------------------------------------------- #
def _plan_user_tiles(exp_ind, n_items, block_m):
    """Returns (dest, tile_uid, n_pad):
       dest[n]     padded row index of original item n
       tile_uid[t] user id owning tile t (every tile is single-user)
       n_pad       total padded rows (= num_tiles * block_m)
    """
    exp_ind = np.asarray(exp_ind, dtype=np.int64)
    order = np.argsort(exp_ind, kind="stable")             # group items by user
    counts_all = np.bincount(exp_ind)
    users = np.flatnonzero(counts_all)                      # users that appear, ascending
    counts = counts_all[users]
    padded = ((counts + block_m - 1) // block_m) * block_m
    pad_off = np.concatenate(([0], np.cumsum(padded)))      # per-user padded start
    run_off = np.concatenate(([0], np.cumsum(counts)))      # per-user start (sorted order)
    n_pad = int(pad_off[-1])
    within = np.arange(n_items, dtype=np.int64) - np.repeat(run_off[:-1], counts)
    dest_sorted = np.repeat(pad_off[:-1], counts) + within
    dest = np.empty(n_items, dtype=np.int64)
    dest[order] = dest_sorted
    tile_uid = np.repeat(users, padded // block_m).astype(np.int32)
    return dest, tile_uid, n_pad


def _pick_block_m(n_items, n_users, d, itemsize):
    # Tile ~ typical per-user run length (keeps per-user padding waste ~< 2x),
    # capped so double-buffered emb/out/morph blocks stay well under v5e's
    # 16 MiB default scoped VMEM (the morph block is (D, D) regardless of bm).
    vmem_budget = 12 << 20
    per_row = 2 * 2 * d * max(int(itemsize), 4)            # emb + out, 2 buffers, f32 bound
    fixed = 2 * d * d * max(int(itemsize), 4)              # morph double buffer
    cap = max(8, (vmem_budget - fixed) // per_row)
    avg_run = -(-n_items // max(1, n_users))
    bm = min(512, int(cap), ((avg_run + 7) // 8) * 8)
    return int(max(8, (bm // 8) * 8))


# --------------------------------------------------------------------------- #
# Wrapper
# --------------------------------------------------------------------------- #
def segment3_pallas(emb, seg2_out, exp_ind, *, block_m=None):
    """emb: (N, D), seg2_out: (U, D, D), exp_ind: (N,) host ints -> (N, D)."""
    N, D = emb.shape
    U, D1, D2 = seg2_out.shape
    assert D1 == D and D2 == D, "seg2_out must be (U, D, D)"
    if N == 0:
        return jnp.zeros((0, D), emb.dtype)

    exp_ind_np = np.asarray(exp_ind, dtype=np.int64).reshape(-1)
    assert exp_ind_np.shape[0] == N
    assert exp_ind_np.min() >= 0 and exp_ind_np.max() < U, "exp_ind out of range"

    if block_m is None:
        block_m = _pick_block_m(N, len(np.unique(exp_ind_np)), D,
                                jnp.dtype(seg2_out.dtype).itemsize)
    assert block_m % 8 == 0

    dest_np, tile_uid_np, n_pad = _plan_user_tiles(exp_ind_np, N, block_m)
    n_tiles = n_pad // block_m

    dest = jnp.asarray(dest_np, dtype=jnp.int32)
    emb_pad = jnp.zeros((n_pad, D), emb.dtype).at[dest].set(emb)   # padded rows = 0 -> out 0

    emb_isz = jnp.dtype(emb.dtype).itemsize
    morph_isz = jnp.dtype(seg2_out.dtype).itemsize
    cost = pl.CostEstimate(
        flops=int(2 * n_pad * D * D),
        transcendentals=int(n_pad),
        bytes_accessed=int(2 * n_pad * D * emb_isz + n_tiles * D * D * morph_isz),
    )

    out_pad = pl.pallas_call(
        _segment3_kernel,
        out_shape=jax.ShapeDtypeStruct((n_pad, D), emb.dtype),
        grid_spec=pltpu.PrefetchScalarGridSpec(
            num_scalar_prefetch=1,
            grid=(n_tiles,),
            in_specs=[
                pl.BlockSpec((block_m, D), lambda t, uid: (t, 0)),
                # data-dependent gather: one (D, D) matrix per single-user tile
                pl.BlockSpec((1, D, D), lambda t, uid: (uid[t], 0, 0)),
            ],
            out_specs=pl.BlockSpec((block_m, D), lambda t, uid: (t, 0)),
        ),
        compiler_params=pltpu.CompilerParams(dimension_semantics=("parallel",)),
        cost_estimate=cost,
    )(jnp.asarray(tile_uid_np, dtype=jnp.int32), emb_pad, seg2_out)

    return out_pad[dest]


# --------------------------------------------------------------------------- #
# Module-level glue (mirrors the PyTorch forward)
# --------------------------------------------------------------------------- #
def expand_offsets(offsets):
    """numpy equivalent of scipy._sparsetools.expandptr: CSR offsets -> row ids."""
    offsets = np.asarray(offsets, dtype=np.int64)
    counts = np.diff(offsets)
    return np.repeat(np.arange(len(counts), dtype=np.int64), counts)


def segment3_forward(batch, item_emb, seg2_out):
    items = jnp.asarray(batch['novel_items'], dtype=jnp.int32)
    emb = item_emb[items]                                           # (N, D) gather (cheap)
    if 'novel_userids' in batch:
        exp_ind = np.asarray(batch['novel_userids'], dtype=np.int64)
    else:
        offs = np.append(np.asarray(batch['novel_offsets']), int(items.shape[0]))
        exp_ind = expand_offsets(offs)
    return segment3_pallas(emb, seg2_out, exp_ind)


# --------------------------------------------------------------------------- #
# Demo / correctness check
# --------------------------------------------------------------------------- #
if __name__ == "__main__":
    key = jax.random.PRNGKey(0)
    V, U, D = 16, 4, 32            # vocab, users, hidden
    k1, k2 = jax.random.split(key)
    item_emb = jax.random.normal(k1, (V, D), dtype=jnp.float32)
    seg2_out = 0.1 * jax.random.normal(k2, (U, D, D), dtype=jnp.float32)

    def reference(items_np, exp_ind_np):
        items = jnp.asarray(items_np, dtype=jnp.int32)
        exp_ind = jnp.asarray(exp_ind_np, dtype=jnp.int32)
        emb = item_emb[items]
        morph = seg2_out[exp_ind]
        y = jnp.einsum('nk,nkj->nj', emb, morph,
                       precision=jax.lax.Precision.HIGHEST)
        z = emb + y
        return z / jnp.maximum(jnp.linalg.norm(z, axis=1, keepdims=True), 1e-12)

    # 1) CSR-offsets path (10 novel items over 4 users, ragged runs)
    batch = {
        'novel_items': np.array([1, 3, 5, 7, 2, 4, 6, 8, 9, 11], dtype=np.int64),
        'novel_offsets': np.array([0, 3, 5, 9], dtype=np.int64),
    }
    out = jax.block_until_ready(segment3_forward(batch, item_emb, seg2_out))
    offs = np.append(batch['novel_offsets'], len(batch['novel_items']))
    ref = reference(batch['novel_items'], expand_offsets(offs))
    assert out.shape == ref.shape
    # atol covers the MXU's default-precision f32 matmul path at D=32.
    assert jnp.allclose(out, ref, atol=2e-3, rtol=2e-3), "CSR path mismatch vs reference"

    # 2) explicit (unsorted) novel_userids path
    batch2 = {
        'novel_items': np.array([0, 7, 2, 9, 5], dtype=np.int64),
        'novel_userids': np.array([2, 0, 2, 1, 0], dtype=np.int64),
    }
    out2 = jax.block_until_ready(segment3_forward(batch2, item_emb, seg2_out))
    ref2 = reference(batch2['novel_items'], batch2['novel_userids'])
    assert jnp.allclose(out2, ref2, atol=2e-3, rtol=2e-3), "userids path mismatch vs reference"

    print("KERNEL_OK")
</pallas_src>

<mosaic_0001>
module attributes {stable_mosaic.version = 11 : i64} {
  func.func @_segment3_kernel(%arg0: i32, %arg1: memref<4xi32, #tpu.memory_space<smem>>, %arg2: memref<8x32xf32, #tpu.memory_space<vmem>>, %arg3: memref<1x32x32xf32, #tpu.memory_space<vmem>>, %arg4: memref<8x32xf32, #tpu.memory_space<vmem>>) attributes {dimension_semantics = [#tpu.dimension_semantics<parallel>], iteration_bounds = array<i64: 4>, scalar_prefetch = 1 : i64, scratch_operands = 0 : i64, tpu.core_type = #tpu.core_type<tc>, window_params = [{transform_indices = @transform_0, window_bounds = array<i64: 8, 32>}, {transform_indices = @transform_1, window_bounds = array<i64: 1, 32, 32>}, {transform_indices = @transform_2, window_bounds = array<i64: 8, 32>}]} {
    %c0 = arith.constant 0 : index
    %c0_0 = arith.constant 0 : index
    %0 = vector.load %arg2[%c0, %c0_0] : memref<8x32xf32, #tpu.memory_space<vmem>>, vector<8x32xf32>
    %c0_1 = arith.constant 0 : index
    %c0_2 = arith.constant 0 : index
    %c0_3 = arith.constant 0 : index
    %1 = vector.load %arg3[%c0_1, %c0_2, %c0_3] : memref<1x32x32xf32, #tpu.memory_space<vmem>>, vector<1x32x32xf32>
    %2 = vector.shape_cast %1 : vector<1x32x32xf32> to vector<32x32xf32>
    %cst = arith.constant dense<0.000000e+00> : vector<8x32xf32>
    %3 = tpu.matmul %0, %2, %cst {dimension_numbers = #tpu.dot_dimension_numbers<[1], [0], [0], [1], [0, 0, 1, 1], [], []>} : vector<8x32xf32>, vector<32x32xf32>, vector<8x32xf32> -> vector<8x32xf32>
    %4 = arith.addf %0, %3 : vector<8x32xf32>
    %5 = arith.mulf %4, %4 : vector<8x32xf32>
    %cst_4 = arith.constant dense<0.000000e+00> : vector<8xf32>
    %6 = vector.multi_reduction <add>, %5, %cst_4 [1] : vector<8x32xf32> to vector<8xf32>
    %7 = vector.shape_cast %6 : vector<8xf32> to vector<8x1xf32>
    %cst_5 = arith.constant 1.000000e-24 : f32
    %8 = vector.broadcast %cst_5 : f32 to vector<8x1xf32>
    %9 = arith.maximumf %7, %8 : vector<8x1xf32>
    %10 = math.rsqrt %9 : vector<8x1xf32>
    %11 = vector.broadcast %10 : vector<8x1xf32> to vector<8x32xf32>
    %12 = arith.mulf %4, %11 : vector<8x32xf32>
    %c0_6 = arith.constant 0 : index
    %c0_7 = arith.constant 0 : index
    %13 = vector.load %arg4[%c0_6, %c0_7] : memref<8x32xf32, #tpu.memory_space<vmem>>, vector<8x32xf32>
    tpu.vector_store %arg4[%c0_6, %c0_7], %12 {strides = array<i32>} : memref<8x32xf32, #tpu.memory_space<vmem>>, vector<8x32xf32>,
    return
  }
  func.func @transform_0(%arg0: i32, %arg1: memref<4xi32, #tpu.memory_space<smem>>) -> (i32, i32) {
    %c0_i32 = arith.constant 0 : i32
    %c0_i32_0 = arith.constant 0 : i32
    return %arg0, %c0_i32 : i32, i32
  }
  func.func @transform_1(%arg0: i32, %arg1: memref<4xi32, #tpu.memory_space<smem>>) -> (i32, i32, i32) {
    %0 = arith.index_cast %arg0 : i32 to index
    %1 = memref.load %arg1[%0] : memref<4xi32, #tpu.memory_space<smem>>
    %c0_i32 = arith.constant 0 : i32
    %c0_i32_0 = arith.constant 0 : i32
    %c0_i32_1 = arith.constant 0 : i32
    return %1, %c0_i32, %c0_i32_0 : i32, i32, i32
  }
  func.func @transform_2(%arg0: i32, %arg1: memref<4xi32, #tpu.memory_space<smem>>) -> (i32, i32) {
    %c0_i32 = arith.constant 0 : i32
    %c0_i32_0 = arith.constant 0 : i32
    return %arg0, %c0_i32 : i32, i32
  }
}

</mosaic_0001>

<llo_original>
// kernel: tpu_custom_call.1
$region0: #{tpu_custom_call.1}
  #allocation0 [shape = 'u32[]', space=smem, size = 0x4, offset = 0x4, fixed_abs, tag = 'smem constant byte address 0x4 - core index']
  #allocation1 [shape = 'u32[144,128]{1,0:T(1,128)}', space=vmem, size = 0x12000, scoped, tag = 'internal scratch']
  #allocation2 [shape = 's32[1]{0}', space=sflag, size = 0x4, scoped, tag = 'scoped memory for tpu_custom_call.1']
  #allocation3 [shape = 'u8[512]{0}', space=smem, size = 0x200, scoped, tag = 'prefetched SMEM operand 0']
  %s0 = inlined_call_operand.hbm [shape: s32[4], index: 0, kind: input, shape index: {}]
  %s1 = inlined_call_operand.hbm [shape: f32[32,32], index: 1, kind: input, shape index: {}]
  %s2 = inlined_call_operand.hbm [shape: f32[4,32,32], index: 2, kind: input, shape index: {}]
  %s3 = inlined_call_operand.hbm [shape: f32[32,32], index: 3, kind: output, shape index: {}]
  %s4 = sld [smem:[#allocation0]]
  $region49: #{tpu_custom_call.1} parent=0
    _
  %s6 = ssub.s32 1, %s4
  %s7 = scalar_select 0, %s6, %s4
  %9 = dma.hbm_to_smem %s0, 16, [#allocation3], [#allocation2]
  %10 = dma.done [#allocation2], 16
  %11 = sfence
  $region1: #{tpu_custom_call.1} parent=0
    #allocation4 [shape = 'u8[8192]{0}', space=vmem, size = 0x2000, scoped, tag = 'input window, operand 1']
    #allocation5 [shape = 's32[2]{0}', space=sflag, size = 0x8, scoped, tag = 'scoped memory for tpu_custom_call.1']
    #allocation6 [shape = 's32[2]{0}', space=sflag, size = 0x8, scoped, tag = 'scoped memory for tpu_custom_call.1']
    #allocation7 [shape = 'u8[32768]{0}', space=vmem, size = 0x8000, scoped, tag = 'input window, operand 2']
    #allocation8 [shape = 's32[2]{0}', space=sflag, size = 0x8, scoped, tag = 'scoped memory for tpu_custom_call.1']
    #allocation9 [shape = 'u8[8192]{0}', space=vmem, size = 0x2000, scoped, tag = 'output window, operand 0']
    %12 = vsyncpa [#allocation5], 0
    %s13 = scalar_lea.sflag [#allocation5], 1
    %14 = vsyncpa %s13, 0
    %15 = vsyncpa [#allocation8], 0
    %s16 = scalar_lea.sflag [#allocation8], 1
    %17 = vsyncpa %s16, 0
    %18 = vsyncpa [#allocation6], 0
    %s19 = scalar_lea.sflag [#allocation6], 1
    %20 = vsyncpa %s19, 0
    loop: start=0, step=1, limit=6
    $region2: #{tpu_custom_call.1} parent=1 // loop_pre_header
      _
    $region3: #{tpu_custom_call.1} parent=1 // loop_header
      %s22 = sphi 0, %s26
      %p23 = scmp.ge.s32.totalorder %s22, 6
      %s32 = sphi 0, %s34
      %s35 = sphi 0, %s32
      %s36 = sphi 0, %s35
      %s52 = sphi 0, %s36
      %s60 = sphi 0, %s62
      %s63 = sphi 0, %s60
      %s64 = sphi 0, %s63
      %s80 = sphi 0, %s64
      %s86 = sphi 0, %s88
      %s89 = sphi 0, %s86
      %s90 = sphi 0, %s89
      %s106 = sphi 0, %s90
    $region4: #{tpu_custom_call.1} parent=1 // loop_header_branch
      %25 = sbr.rel (%p23) target = $region8
    $region5: #{tpu_custom_call.1} parent=1 // loop_body
      %s27 = ssub.s32 %s22, 1
      %s28 = ssub.s32 %s22, 2
      %s29 = sadd.s32 %s22, 1
      %s30 = ssub.s32 %s22, %s29
      %p31 = scmp.eq.s32.totalorder %s30, 0
      %s33 = sadd.s32 %s32, 1
      %s34 = scalar_select %p31, %s32, %s33
      %p37 = pneg %p31
      %p38 = scmp.eq.s32.totalorder %s22, 3
      %p39 = por %p37, %p38
      %p40 = scmp.ne.s32.totalorder %s32, %s35
      %p41 = scmp.eq.s32.totalorder %s22, 0
      %p42 = por %p40, %p41
      %p43 = scmp.ne.s32.totalorder %s32, %s35
      %p44 = scmp.eq.s32.totalorder %s27, 3
      %p45 = por %p43, %p44
      %p46 = scmp.ne.s32.totalorder %s35, %s36
      %p47 = scmp.eq.s32.totalorder %s27, 0
      %p48 = por %p46, %p47
      %p49 = scmp.ne.s32.totalorder %s35, %s36
      %p50 = scmp.eq.s32.totalorder %s28, 3
      %p51 = por %p49, %p50
      %p53 = scmp.ne.s32.totalorder %s36, %s52
      %p54 = scmp.eq.s32.totalorder %s28, 0
      %p55 = por %p53, %p54
      %s56 = sld [smem:[#allocation3 + %s22]]
      %s57 = sld [smem:[#allocation3 + %s29]]
      %s58 = ssub.s32 %s56, %s57
      %p59 = scmp.eq.s32.totalorder %s58, 0
      %s61 = sadd.s32 %s60, 1
      %s62 = scalar_select %p59, %s60, %s61
      %p65 = pneg %p59
      %p66 = scmp.eq.s32.totalorder %s22, 3
      %p67 = por %p65, %p66
      %p68 = scmp.ne.s32.totalorder %s60, %s63
      %p69 = scmp.eq.s32.totalorder %s22, 0
      %p70 = por %p68, %p69
      %p71 = scmp.ne.s32.totalorder %s60, %s63
      %p72 = scmp.eq.s32.totalorder %s27, 3
      %p73 = por %p71, %p72
      %p74 = scmp.ne.s32.totalorder %s63, %s64
      %p75 = scmp.eq.s32.totalorder %s27, 0
      %p76 = por %p74, %p75
      %p77 = scmp.ne.s32.totalorder %s63, %s64
      %p78 = scmp.eq.s32.totalorder %s28, 3
      %p79 = por %p77, %p78
      %p81 = scmp.ne.s32.totalorder %s64, %s80
      %p82 = scmp.eq.s32.totalorder %s28, 0
      %p83 = por %p81, %p82
      %s84 = ssub.s32 %s22, %s29
      %p85 = scmp.eq.s32.totalorder %s84, 0
      %s87 = sadd.s32 %s86, 1
      %s88 = scalar_select %p85, %s86, %s87
      %p91 = pneg %p85
      %p92 = scmp.eq.s32.totalorder %s22, 3
      %p93 = por %p91, %p92
      %p94 = scmp.ne.s32.totalorder %s86, %s89
      %p95 = scmp.eq.s32.totalorder %s22, 0
      %p96 = por %p94, %p95
      %p97 = scmp.ne.s32.totalorder %s86, %s89
      %p98 = scmp.eq.s32.totalorder %s27, 3
      %p99 = por %p97, %p98
      %p100 = scmp.ne.s32.totalorder %s89, %s90
      %p101 = scmp.eq.s32.totalorder %s27, 0
      %p102 = por %p100, %p101
      %p103 = scmp.ne.s32.totalorder %s89, %s90
      %p104 = scmp.eq.s32.totalorder %s28, 3
      %p105 = por %p103, %p104
      %p107 = scmp.ne.s32.totalorder %s90, %s106
      %p108 = scmp.eq.s32.totalorder %s28, 0
      %p109 = por %p107, %p108
      %p110 = scmp.le.s32.totalorder 1, %s22
      %p111 = scmp.lt.s32.totalorder %s22, 5
      %p112 = pnand %p110, %p111
      %p113 = pneg %p112
      // Predicated region
      $region9: #{tpu_custom_call.1} parent=5 // pred_check
        _
      $region10: #{tpu_custom_call.1} parent=5 // pred_check_branch
        %115 = sbr.rel (%p112) target = $region12
      $region11: #{tpu_custom_call.1} parent=5 // pred_region
        %s116 = ssub.s32 %s22, 1
      $region12: #{tpu_custom_call.1} parent=5 // pred_fallthru
        _
      %p117 = scmp.lt.s32.totalorder %s22, 4
      // Predicated region
      $region13: #{tpu_custom_call.1} parent=5 // pred_check
        %p118 = pneg %p117
      $region14: #{tpu_custom_call.1} parent=5 // pred_check_branch
        %120 = sbr.rel (%p118) target = $region16
      $region15: #{tpu_custom_call.1} parent=5 // pred_region
        // Predicated region
        $region17: #{tpu_custom_call.1} parent=15 // pred_check
          %p121 = pneg %p42
        $region18: #{tpu_custom_call.1} parent=15 // pred_check_branch
          %123 = sbr.rel (%p121) target = $region20
        $region19: #{tpu_custom_call.1} parent=15 // pred_region
          %s124 = sand.u32 %s32, 1
          %s125 = scalar_lea.sflag [#allocation5], %s124
          %s126 = sand.u32 %s32, 1
          %s127 = smul.addr %s126, 8
          %s128 = scalar_lea.vmem [#allocation4], %s127
          %s130 = ssub.s32 128, 128
          %131 = vsyncadd %s125, %s130
          %s132 = smul.addr %s22, 128
          %s133 = scalar_lea.hbm %s1, %s132
          %s135 = sshll.u32 %s128, 4
          %s136 = int_to_ptr.vmem [resolvable:$true] %s135
          %138 = dma.hbm_to_vmem [thread:$0]  %s133, 128, %s136, %s125
        $region20: #{tpu_custom_call.1} parent=15 // pred_fallthru
          _
        // Predicated region
        $region21: #{tpu_custom_call.1} parent=15 // pred_check
          %p139 = pneg %p70
        $region22: #{tpu_custom_call.1} parent=15 // pred_check_branch
          %141 = sbr.rel (%p139) target = $region24
        $region23: #{tpu_custom_call.1} parent=15 // pred_region
          %s142 = sand.u32 %s60, 1
          %s143 = scalar_lea.sflag [#allocation8], %s142
          %s144 = sand.u32 %s60, 1
          %s145 = smul.addr %s144, 32
          %s146 = scalar_lea.vmem [#allocation7], %s145
          %s147 = sld [smem:[#allocation3 + %s22]]
          %s149 = ssub.s32 512, 512
          %150 = vsyncadd %s143, %s149
          %s151 = smul.addr %s147, 4
          %s152 = smul.addr %s151, 128
          %s153 = scalar_lea.hbm %s2, %s152
          %s154 = sshll.u32 %s146, 4
          %s155 = int_to_ptr.vmem [resolvable:$true] %s154
          %160 = dma.hbm_to_vmem [thread:$0]  %s153, 512, %s155, %s143, 128, 128, 8
        $region24: #{tpu_custom_call.1} parent=15 // pred_fallthru
          _
      $region16: #{tpu_custom_call.1} parent=5 // pred_fallthru
        _
      %p161 = scmp.le.s32.totalorder 1, %s22
      %p162 = scmp.lt.s32.totalorder %s22, 5
      %p163 = pnand %p161, %p162
      %p164 = pneg %p163
      // Predicated region
      $region25: #{tpu_custom_call.1} parent=5 // pred_check
        _
      $region26: #{tpu_custom_call.1} parent=5 // pred_check_branch
        %166 = sbr.rel (%p163) target = $region28
      $region27: #{tpu_custom_call.1} parent=5 // pred_region
        %s167 = ssub.s32 %s22, 1
        %s168 = sand.u32 %s35, 1
        %s169 = scalar_lea.sflag [#allocation5], %s168
        %s170 = sand.u32 %s35, 1
        %s171 = smul.addr %s170, 8
        %s172 = scalar_lea.vmem [#allocation4], %s171
        // Predicated region
        $region29: #{tpu_custom_call.1} parent=27 // pred_check
          %p173 = pneg %p48
        $region30: #{tpu_custom_call.1} parent=27 // pred_check_branch
          %175 = sbr.rel (%p173) target = $region32
        $region31: #{tpu_custom_call.1} parent=27 // pred_region
          %176 = dma.done %s169, 128
        $region32: #{tpu_custom_call.1} parent=27 // pred_fallthru
          _
        %s177 = sand.u32 %s63, 1
        %s178 = scalar_lea.sflag [#allocation8], %s177
        %s179 = sand.u32 %s63, 1
        %s180 = smul.addr %s179, 32
        %s181 = scalar_lea.vmem [#allocation7], %s180
        // Predicated region
        $region33: #{tpu_custom_call.1} parent=27 // pred_check
          %p182 = pneg %p76
        $region34: #{tpu_custom_call.1} parent=27 // pred_check_branch
          %184 = sbr.rel (%p182) target = $region36
        $region35: #{tpu_custom_call.1} parent=27 // pred_region
          %185 = dma.done %s178, 512
        $region36: #{tpu_custom_call.1} parent=27 // pred_fallthru
          _
        %s186 = sand.u32 %s35, 1
        %s187 = scalar_lea.sflag [#allocation5], %s186
        %s188 = sand.u32 %s35, 1
        %s189 = smul.addr %s188, 8
        %s190 = scalar_lea.vmem [#allocation4], %s189
        %p191 = pneg %p48
        %p192 = pneg %p45
        %s193 = sand.u32 %s63, 1
        %s194 = scalar_lea.sflag [#allocation8], %s193
        %s195 = sand.u32 %s63, 1
        %s196 = smul.addr %s195, 32
        %s197 = scalar_lea.vmem [#allocation7], %s196
        %p198 = pneg %p76
        %p199 = pneg %p73
        %p200 = pneg %p102
        %p201 = pneg %p99
        %s202 = sand.u32 %s89, 1
        %s203 = scalar_lea.sflag [#allocation6], %s202
        %s204 = sand.u32 %s89, 1
        %s205 = smul.addr %s204, 8
        %s206 = scalar_lea.vmem [#allocation9], %s205
        %s207 = sld [smem:[#allocation3 + %s27]]
        %v208 = vld [vmem:[%s172] sm:$0xff]
        %v209 = vld [vmem:[%s181] sm:$0xff]
        %v210 = vld [vmem:[%s181 + $0x8] sm:$0xff]
        %v211 = vld [vmem:[%s181 + $0x10] sm:$0xff]
        %v212 = vld [vmem:[%s181 + $0x18] sm:$0xff]
        %vm213 = vcmask 261120
        %v215 = vsel %vm213, %v208, 0
        %217 = vmatprep.subr.mxu0 0.0
        %218 = vmatpush1.msra.mxu0 %v209
        %219 = vmatprep.subr.mxu0 0.0
        %220 = vmatpush1.msra.mxu0 %v210
        %221 = vmatprep.subr.mxu0 0.0
        %222 = vmatpush1.msra.mxu0 %v211
        %223 = vmatprep.subr.mxu0 0.0
        %224 = vmatpush1.msra.mxu0 %v212
        %225 = vmatprep.subr.mxu0 0.0
        %226 = vmatpush1.msra.mxu0 0.0
        %227 = vmatprep.subr.mxu0 0.0
        %228 = vmatpush1.msra.mxu0 0.0
        %229 = vmatprep.subr.mxu0 0.0
        %230 = vmatpush1.msra.mxu0 0.0
        %231 = vmatprep.subr.mxu0 0.0
        %232 = vmatpush1.msra.mxu0 0.0
        %233 = vmatprep.subr.mxu0 0.0
        %234 = vmatpush1.msra.mxu0 0.0
        %235 = vmatprep.subr.mxu0 0.0
        %236 = vmatpush1.msra.mxu0 0.0
        %237 = vmatprep.subr.mxu0 0.0
        %238 = vmatpush1.msra.mxu0 0.0
        %239 = vmatprep.subr.mxu0 0.0
        %240 = vmatpush1.msra.mxu0 0.0
        %241 = vmatprep.subr.mxu0 0.0
        %242 = vmatpush1.msra.mxu0 0.0
        %243 = vmatprep.subr.mxu0 0.0
        %244 = vmatpush1.msra.mxu0 0.0
        %245 = vmatprep.subr.mxu0 0.0
        %246 = vmatpush1.msra.mxu0 0.0
        %247 = vmatprep.subr.mxu0 0.0
        %248 = vmatpush1.msra.mxu0 0.0
        %249 = vmatprep.subr.mxu0 0.0
        %250 = vmatpush1.msra.mxu0 0.0
        %251 = vmatprep.subr.mxu0 0.0
        %252 = vmatpush1.msra.mxu0 0.0
        %253 = vmatprep.subr.mxu0 0.0
        %254 = vmatpush1.msra.mxu0 0.0
        %255 = vmatprep.subr.mxu0 0.0
        %256 = vmatpush1.msra.mxu0 0.0
        %257 = vmatprep.subr.mxu0 0.0
        %258 = vmatpush1.msra.mxu0 0.0
        %259 = vmatprep.subr.mxu0 0.0
        %260 = vmatpush1.msra.mxu0 0.0
        %261 = vmatprep.subr.mxu0 0.0
        %262 = vmatpush1.msra.mxu0 0.0
        %263 = vmatprep.subr.mxu0 0.0
        %264 = vmatpush1.msra.mxu0 0.0
        %265 = vmatprep.subr.mxu0 0.0
        %266 = vmatpush1.msra.mxu0 0.0
        %267 = vmatprep.subr.mxu0 0.0
        %268 = vmatpush1.msra.mxu0 0.0
        %269 = vmatprep.subr.mxu0 0.0
        %270 = vmatpush1.msra.mxu0 0.0
        %271 = vmatprep.subr.mxu0 0.0
        %272 = vmatpush1.msra.mxu0 0.0
        %273 = vmatprep.subr.mxu0 0.0
        %274 = vmatpush1.msra.mxu0 0.0
        %275 = vmatprep.subr.mxu0 0.0
        %276 = vmatpush1.msra.mxu0 0.0
        %277 = vmatprep.subr.mxu0 0.0
        %278 = vmatpush1.msra.mxu0 0.0
        %279 = vmatprep.subr.mxu0 0.0
        %280 = vmatpush1.msra.mxu0 0.0
        %281 = vmatprep.mubr.f32.mxu0 0.0
        %282 = vmatmul.mubr.f32.gmra.mrb[0].mxu0 %v215
        %v283 = vpop.f32.mrb[0].mxu0
        %v284 = vadd.f32 0.0, %v283
        %v285 = vpop.f32.mrb[0].mxu0
        %286 = vdwg.mxu0
        %v287 = vadd.f32 %v208, %v284
        %v288 = vmul.f32 %v287, %v287
        %v289 = vsel %vm213, %v288, 0.0
        %290 = vadd.xlane.f32.xlu0 %v289
        %v291 = vpop.xlane.xlu0 %290
        %v292 = vmax.f32 %v291, 1e-24
        %v293 = vrsqrt.pop %v292
        %v294 = vmul.f32 %v287, %v293
        %295 = vst.msk [vmem:[%s206] sm:$0xff] %vm213, %v294
        %s296 = sand.u32 %s89, 1
        %s297 = scalar_lea.sflag [#allocation6], %s296
        %s298 = sand.u32 %s89, 1
        %s299 = smul.addr %s298, 8
        %s300 = scalar_lea.vmem [#allocation9], %s299
        // Predicated region
        $region37: #{tpu_custom_call.1} parent=27 // pred_check
          %p301 = pneg %p99
        $region38: #{tpu_custom_call.1} parent=27 // pred_check_branch
          %303 = sbr.rel (%p301) target = $region40
        $region39: #{tpu_custom_call.1} parent=27 // pred_region
          %s305 = ssub.s32 128, 128
          %306 = vsyncadd %s297, %s305
          %s307 = smul.addr %s27, 128
          %s308 = scalar_lea.hbm %s3, %s307
          %s310 = sshll.u32 %s300, 4
          %s311 = int_to_ptr.vmem [resolvable:$true] %s310
          %313 = dma.vmem_to_hbm [thread:$0]  %s311, 128, %s308, %s297
        $region40: #{tpu_custom_call.1} parent=27 // pred_fallthru
          _
      $region28: #{tpu_custom_call.1} parent=5 // pred_fallthru
        _
      %p314 = scmp.le.s32.totalorder 2, %s22
      // Predicated region
      $region41: #{tpu_custom_call.1} parent=5 // pred_check
        %p315 = pneg %p314
      $region42: #{tpu_custom_call.1} parent=5 // pred_check_branch
        %317 = sbr.rel (%p315) target = $region44
      $region43: #{tpu_custom_call.1} parent=5 // pred_region
        %s318 = ssub.s32 %s22, 2
        // Predicated region
        $region45: #{tpu_custom_call.1} parent=43 // pred_check
          %p319 = pneg %p105
        $region46: #{tpu_custom_call.1} parent=43 // pred_check_branch
          %321 = sbr.rel (%p319) target = $region48
        $region47: #{tpu_custom_call.1} parent=43 // pred_region
          %s322 = sand.u32 %s90, 1
          %s323 = scalar_lea.sflag [#allocation6], %s322
          %s324 = sand.u32 %s90, 1
          %s325 = smul.addr %s324, 8
          %s326 = scalar_lea.vmem [#allocation9], %s325
          %327 = dma.done %s323, 128
        $region48: #{tpu_custom_call.1} parent=43 // pred_fallthru
          _
      $region44: #{tpu_custom_call.1} parent=5 // pred_fallthru
        _
    $region6: #{tpu_custom_call.1} parent=1 // loop_footer
      %s26 = sadd.s32 1, %s22
    $region7: #{tpu_custom_call.1} parent=1 // loop_footer_branch
      %21 = sbr.rel target = $region3
    $region8: #{tpu_custom_call.1} parent=1 // loop_exit
      _
    %328 = vsyncpa [#allocation5], 1
    %s329 = scalar_lea.sflag [#allocation5], 1
    %330 = vsyncpa %s329, 1
    %331 = vsyncpa [#allocation8], 1
    %s332 = scalar_lea.sflag [#allocation8], 1
    %333 = vsyncpa %s332, 1
    %334 = vsyncpa [#allocation6], 1
    %s335 = scalar_lea.sflag [#allocation6], 1
    %336 = vsyncpa %s335, 1

</llo_original>
